<compile_context>
chip_gen: v7x
topology: tpu7x:2x2x1
jax: 0.10.0
libtpu: 0.0.40
codegen_flags: <defaults>
</compile_context>

<pallas_src>
import functools

import jax
import jax.numpy as jnp
from jax.experimental import pallas as pl
from jax.experimental.pallas import tpu as pltpu


_LANE_WIDTH = 1024      # lane-dense slab width (large multiple of 128)
_MAX_BLOCK_ROWS = 512   # 512 x 1024 f32 tile = 2 MiB -> 8 MiB double-buffered


def _envelope_kernel(d_ref, o_ref, *, p, a, b, c):
    d = d_ref[...]
    # d^(p-1) via static integer power (exponent is a compile-time constant).
    d_p = jax.lax.integer_pow(d, p - 1)
    d_p_1 = d_p * d        # d^p
    d_p_2 = d_p_1 * d      # d^(p+1)
    env = pl.reciprocal(d, approx=False) + a * d_p + b * d_p_1 + c * d_p_2
    mask = (d < 1.0).astype(d.dtype)
    o_ref[...] = env * mask


def envelope(d: jax.Array, exponent: int) -> jax.Array:
    """Elementwise DimeNet envelope. Accepts any input shape/size."""
    p = exponent + 1
    a = -(p + 1) * (p + 2) / 2.0
    b = float(p * (p + 2))
    c = -p * (p + 1) / 2.0

    orig_shape = d.shape
    orig_dtype = d.dtype
    itemsize = jnp.dtype(orig_dtype).itemsize

    flat = d.reshape(-1)
    total = flat.shape[0]

    # Lay out as a lane-dense 2-D slab (rows, _LANE_WIDTH).
    rows = pl.cdiv(total, _LANE_WIDTH)

    if rows <= _MAX_BLOCK_ROWS:
        # Single block equal to the full array dims (exempt from (8,128) rule).
        block_rows = max(rows, 1)
    else:
        # Balance block sizes across the grid, rounded to a sublane multiple
        # (16 is safe for both f32 and packed bf16).
        num_blocks = pl.cdiv(rows, _MAX_BLOCK_ROWS)
        block_rows = pl.cdiv(rows, num_blocks)
        block_rows = ((block_rows + 15) // 16) * 16

    padded_rows = pl.cdiv(rows, block_rows) * block_rows
    padded_total = padded_rows * _LANE_WIDTH
    pad = padded_total - total
    if pad:
        # Pad value 2.0: finite, masked to zero in-kernel, then dropped below.
        flat = jnp.concatenate(
            [flat, jnp.full((pad,), 2.0, dtype=orig_dtype)], axis=0)
    x2d = flat.reshape(padded_rows, _LANE_WIDTH)

    # Double-buffered input + output, plus headroom.  For the default tile
    # (2 MiB) this is ~16 MiB: within the default scoped VMEM on v5e/v6e/v7x.
    tile_bytes = block_rows * _LANE_WIDTH * itemsize
    vmem_limit = int(4 * tile_bytes + (8 << 20))

    kernel = functools.partial(_envelope_kernel, p=p, a=a, b=b, c=c)

    out2d = pl.pallas_call(
        kernel,
        out_shape=jax.ShapeDtypeStruct((padded_rows, _LANE_WIDTH), orig_dtype),
        grid_spec=pltpu.PrefetchScalarGridSpec(
            num_scalar_prefetch=0,
            grid=(padded_rows // block_rows,),
            in_specs=[pl.BlockSpec((block_rows, _LANE_WIDTH), lambda i: (i, 0))],
            out_specs=pl.BlockSpec((block_rows, _LANE_WIDTH), lambda i: (i, 0)),
        ),
        compiler_params=pltpu.CompilerParams(
            dimension_semantics=("parallel",),
            vmem_limit_bytes=vmem_limit,
        ),
    )(x2d)

    return out2d.reshape(-1)[:total].reshape(orig_shape)


def envelope_ref(d, exponent):
    """Pure-JAX reference mirroring the PyTorch module."""
    p = exponent + 1
    a = -(p + 1) * (p + 2) / 2.0
    b = p * (p + 2)
    c = -p * (p + 1) / 2.0
    d_p = d ** (p - 1)
    d_p_1 = d_p * d
    d_p_2 = d_p_1 * d
    return (1.0 / d + a * d_p + b * d_p_1 + c * d_p_2) * (d < 1.0).astype(d.dtype)


if __name__ == "__main__":
    key = jax.random.PRNGKey(0)
    exponent = 5  # typical DimeNet envelope exponent

    # Small shape consistent with DimeNet usage: a batch of edge distances.
    # Values in (0, 2) so the (d < 1) mask exercises both branches.
    k0, k1 = jax.random.split(key)
    d = jax.random.uniform(
        k0, (16, 128), dtype=jnp.float32, minval=0.05, maxval=2.0)

    out = jax.block_until_ready(envelope(d, exponent))
    ref = envelope_ref(d, exponent)
    assert out.shape == ref.shape and out.dtype == ref.dtype
    assert jnp.allclose(out, ref, rtol=1e-5, atol=1e-5), "mismatch vs reference"

    # Odd, non-divisible shape to exercise the padding / lane-dense repack path.
    d_odd = jax.random.uniform(
        k1, (37, 100), dtype=jnp.float32, minval=0.05, maxval=2.0)
    out_odd = jax.block_until_ready(envelope(d_odd, exponent))
    ref_odd = envelope_ref(d_odd, exponent)
    assert out_odd.shape == ref_odd.shape
    assert jnp.allclose(out_odd, ref_odd, rtol=1e-5, atol=1e-5), "odd-shape mismatch"

    print("KERNEL_OK")
</pallas_src>

<mosaic_0001>
module attributes {stable_mosaic.version = 11 : i64} {
  func.func @_envelope_kernel(%arg0: i32, %arg1: memref<2x1024xf32, #tpu.memory_space<vmem>>, %arg2: memref<2x1024xf32, #tpu.memory_space<vmem>>) attributes {dimension_semantics = [#tpu.dimension_semantics<parallel>], iteration_bounds = array<i64: 1>, scalar_prefetch = 0 : i64, scratch_operands = 0 : i64, tpu.core_type = #tpu.core_type<tc>, window_params = [{transform_indices = @transform_0, window_bounds = array<i64: 2, 1024>}, {transform_indices = @transform_1, window_bounds = array<i64: 2, 1024>}]} {
    %c0 = arith.constant 0 : index
    %c0_0 = arith.constant 0 : index
    %0 = vector.load %arg1[%c0, %c0_0] : memref<2x1024xf32, #tpu.memory_space<vmem>>, vector<2x1024xf32>
    %1 = arith.mulf %0, %0 : vector<2x1024xf32>
    %2 = arith.mulf %1, %1 : vector<2x1024xf32>
    %3 = arith.mulf %0, %2 : vector<2x1024xf32>
    %4 = arith.mulf %3, %0 : vector<2x1024xf32>
    %5 = arith.mulf %4, %0 : vector<2x1024xf32>
    %6 = tpu.reciprocal %0 : vector<2x1024xf32> -> vector<2x1024xf32>
    %cst = arith.constant -2.800000e+01 : f32
    %7 = vector.broadcast %cst : f32 to vector<2x1024xf32>
    %8 = arith.mulf %7, %3 : vector<2x1024xf32>
    %9 = arith.addf %6, %8 : vector<2x1024xf32>
    %cst_1 = arith.constant 4.800000e+01 : f32
    %10 = vector.broadcast %cst_1 : f32 to vector<2x1024xf32>
    %11 = arith.mulf %10, %4 : vector<2x1024xf32>
    %12 = arith.addf %9, %11 : vector<2x1024xf32>
    %cst_2 = arith.constant -2.100000e+01 : f32
    %13 = vector.broadcast %cst_2 : f32 to vector<2x1024xf32>
    %14 = arith.mulf %13, %5 : vector<2x1024xf32>
    %15 = arith.addf %12, %14 : vector<2x1024xf32>
    %cst_3 = arith.constant 1.000000e+00 : f32
    %16 = vector.broadcast %cst_3 : f32 to vector<2x1024xf32>
    %17 = arith.cmpf olt, %0, %16 : vector<2x1024xf32>
    %18 = arith.extui %17 : vector<2x1024xi1> to vector<2x1024xi32>
    %19 = arith.sitofp %18 : vector<2x1024xi32> to vector<2x1024xf32>
    %20 = arith.mulf %15, %19 : vector<2x1024xf32>
    %c0_4 = arith.constant 0 : index
    %c0_5 = arith.constant 0 : index
    %21 = vector.load %arg2[%c0_4, %c0_5] : memref<2x1024xf32, #tpu.memory_space<vmem>>, vector<2x1024xf32>
    tpu.vector_store %arg2[%c0_4, %c0_5], %20 {strides = array<i32>} : memref<2x1024xf32, #tpu.memory_space<vmem>>, vector<2x1024xf32>,
    return
  }
  func.func @transform_0(%arg0: i32) -> (i32, i32) {
    %c0_i32 = arith.constant 0 : i32
    %c0_i32_0 = arith.constant 0 : i32
    return %arg0, %c0_i32 : i32, i32
  }
  func.func @transform_1(%arg0: i32) -> (i32, i32) {
    %c0_i32 = arith.constant 0 : i32
    %c0_i32_0 = arith.constant 0 : i32
    return %arg0, %c0_i32 : i32, i32
  }
}

</mosaic_0001>

<llo_original>
// kernel: tpu_custom_call.1
$region0: #{tpu_custom_call.1}
  #allocation0 [shape = 'u32[]', space=smem, size = 0x4, offset = 0x4, fixed_abs, tag = 'smem constant byte address 0x4 - core index']
  #allocation1 [shape = 'u32[144,128]{1,0:T(1,128)}', space=vmem, size = 0x12000, scoped, tag = 'internal scratch']
  %s0 = inlined_call_operand.hbm [shape: f32[2,1024], index: 0, kind: input, shape index: {}]
  %s1 = inlined_call_operand.hbm [shape: f32[2,1024], index: 1, kind: output, shape index: {}]
  %s2 = sld [smem:[#allocation0]]
  $region18: #{tpu_custom_call.1} parent=0
    _
  %s4 = ssub.s32 1, %s2
  %s5 = scalar_select 0, %s4, %s2
  $region1: #{tpu_custom_call.1} parent=0
    #allocation2 [shape = 'u8[8192]{0}', space=vmem, size = 0x2000, scoped, tag = 'input window, operand 0, single buffered']
    #allocation3 [shape = 's32[1]{0}', space=sflag, size = 0x4, scoped, tag = 'scoped memory for tpu_custom_call.1']
    #allocation4 [shape = 's32[1]{0}', space=sflag, size = 0x4, scoped, tag = 'scoped memory for tpu_custom_call.1']
    #allocation5 [shape = 'u8[8192]{0}', space=vmem, size = 0x2000, scoped, tag = 'output window, operand 0, single buffered']
    %6 = vsyncpa [#allocation3], 0
    %7 = vsyncpa [#allocation4], 0
    // Predicated region
    $region2: #{tpu_custom_call.1} parent=1 // pred_check
      _
    $region3: #{tpu_custom_call.1} parent=1 // pred_check_branch
      %9 = sbr.rel (0) target = $region5
    $region4: #{tpu_custom_call.1} parent=1 // pred_region
      %s11 = ssub.s32 256, 256
      %12 = vsyncadd [#allocation3], %s11
      %s14 = sshll.u32 [#allocation2], 4
      %s15 = int_to_ptr.vmem [resolvable:$true] %s14
      %17 = dma.hbm_to_vmem [thread:$0]  %s0, 256, %s15, [#allocation3]
    $region5: #{tpu_custom_call.1} parent=1 // pred_fallthru
      _
    // Predicated region
    $region6: #{tpu_custom_call.1} parent=1 // pred_check
      _
    $region7: #{tpu_custom_call.1} parent=1 // pred_check_branch
      %19 = sbr.rel (0) target = $region9
    $region8: #{tpu_custom_call.1} parent=1 // pred_region
      %20 = dma.done [#allocation3], 256
    $region9: #{tpu_custom_call.1} parent=1 // pred_fallthru
      _
    %v21 = vld [vmem:[#allocation2] sm:$0xff]
    %v22 = vld [vmem:[#allocation2 + $0x8] sm:$0xff]
    %v23 = vmul.f32 %v21, %v21
    %v24 = vmul.f32 %v22, %v22
    %v25 = vmul.f32 %v23, %v23
    %v26 = vmul.f32 %v24, %v24
    %v27 = vmul.f32 %v21, %v25
    %v28 = vmul.f32 %v22, %v26
    %v29 = vmul.f32 %v27, %v21
    %v30 = vmul.f32 %v28, %v22
    %v31 = vmul.f32 %v29, %v21
    %v32 = vmul.f32 %v30, %v22
    %v33 = vrcp.pop %v21
    %v34 = vrcp.pop %v22
    %v35 = vmul.f32 %v27, -28.0
    %v36 = vmul.f32 %v28, -28.0
    %v37 = vadd.f32 %v33, %v35
    %v38 = vadd.f32 %v34, %v36
    %v39 = vmul.f32 %v29, 48.0
    %v40 = vmul.f32 %v30, 48.0
    %v41 = vadd.f32 %v37, %v39
    %v42 = vadd.f32 %v38, %v40
    %v43 = vmul.f32 %v31, -21.0
    %v44 = vmul.f32 %v32, -21.0
    %v45 = vadd.f32 %v41, %v43
    %v46 = vadd.f32 %v42, %v44
    %vm47 = vcmp.lt.f32.partialorder %v21, 1.0
    %vm48 = vcmp.lt.f32.partialorder %v22, 1.0
    %v49 = vsel %vm47, 1, 0
    %v50 = vsel %vm48, 1, 0
    %v51 = vcvt.s32.f32 %v49
    %v52 = vcvt.s32.f32 %v50
    %v53 = vmul.f32 %v45, %v51
    %v54 = vmul.f32 %v46, %v52
    %55 = vst [vmem:[#allocation5] sm:$0xff] %v53
    %56 = vst [vmem:[#allocation5 + $0x8] sm:$0xff] %v54
    // Predicated region
    $region10: #{tpu_custom_call.1} parent=1 // pred_check
      _
    $region11: #{tpu_custom_call.1} parent=1 // pred_check_branch
      %58 = sbr.rel (0) target = $region13
    $region12: #{tpu_custom_call.1} parent=1 // pred_region
      %s60 = ssub.s32 256, 256
      %61 = vsyncadd [#allocation4], %s60
      %s63 = sshll.u32 [#allocation5], 4
      %s64 = int_to_ptr.vmem [resolvable:$true] %s63
      %66 = dma.vmem_to_hbm [thread:$0]  %s64, 256, %s1, [#allocation4]
    $region13: #{tpu_custom_call.1} parent=1 // pred_fallthru
      _
    // Predicated region
    $region14: #{tpu_custom_call.1} parent=1 // pred_check
      _
    $region15: #{tpu_custom_call.1} parent=1 // pred_check_branch
      %68 = sbr.rel (0) target = $region17
    $region16: #{tpu_custom_call.1} parent=1 // pred_region
      %69 = dma.done [#allocation4], 256
    $region17: #{tpu_custom_call.1} parent=1 // pred_fallthru
      _
    %70 = vsyncpa [#allocation3], 1
    %71 = vsyncpa [#allocation4], 1

</llo_original>
